<compile_context>
chip_gen: v6e
topology: v6e:2x2x1
jax: 0.10.0
libtpu: 0.0.40
codegen_flags: <defaults>
</compile_context>

<pallas_src>
import functools

import jax
import jax.numpy as jnp
from jax import lax
from jax.experimental import pallas as pl
from jax.experimental.pallas import tpu as pltpu


def _cdiv(a, b):
    return (a + b - 1) // b


def _dse_kernel(x_ref,
                w1a_ref, b1a_ref, w1b_ref, b1b_ref,
                w2a_ref, b2a_ref, w2b_ref, b2b_ref,
                out_ref,
                sum_ref, max_ref, scale_ref,
                *, hw_valid, tile_hw, num_tiles, needs_mask):
    p = pl.program_id(1)           # 0 = reduce pass, 1 = apply pass
    t = pl.program_id(2)           # spatial tile index (pass 1 walks tiles in reverse)

    @pl.when(p == 0)
    def _reduce_pass():
        @pl.when(t == 0)
        def _init():
            sum_ref[...] = jnp.zeros(sum_ref.shape, sum_ref.dtype)
            max_ref[...] = jnp.full(max_ref.shape, -jnp.inf, max_ref.dtype)

        x = x_ref[...].astype(jnp.float32)               # (bt, C, T)

        if num_tiles > 1:
            @pl.when(t < num_tiles - 1)
            def _acc_interior():
                # interior tiles are always fully valid -> no mask work
                sum_ref[...] += jnp.sum(x, axis=2, keepdims=True)
                max_ref[...] = jnp.maximum(max_ref[...],
                                           jnp.max(x, axis=2, keepdims=True))

        @pl.when(t == num_tiles - 1)
        def _acc_last_and_finalize():
            if needs_mask:
                # Only the last tile can be ragged; edge-block VMEM padding is undefined,
                # so mask it for both sum and max.
                rem = hw_valid - (num_tiles - 1) * tile_hw
                lane = lax.broadcasted_iota(jnp.int32, (1, 1, tile_hw), 2)
                valid = lane < rem
                xs = jnp.where(valid, x, 0.0)
                xm = jnp.where(valid, x, -jnp.inf)
            else:
                xs = x
                xm = x
            sum_ref[...] += jnp.sum(xs, axis=2, keepdims=True)
            max_ref[...] = jnp.maximum(max_ref[...],
                                       jnp.max(xm, axis=2, keepdims=True))

            # ---- tiny SE matmuls, once per batch block ----
            gp = jnp.sum(sum_ref[...], axis=2) * (1.0 / hw_valid)   # (bt, C) mean
            mx = jnp.max(max_ref[...], axis=2)                      # (bt, C) max
            h1 = jnp.maximum(
                jnp.dot(gp, w1a_ref[...], preferred_element_type=jnp.float32)
                + b1a_ref[...], 0.0)
            se = jax.nn.sigmoid(
                jnp.dot(h1, w1b_ref[...], preferred_element_type=jnp.float32)
                + b1b_ref[...])
            # sigmoid > 0  =>  max_spatial(x * se) == se * max_spatial(x)
            gap = se * mx
            h2 = jnp.maximum(
                jnp.dot(gap, w2a_ref[...], preferred_element_type=jnp.float32)
                + b2a_ref[...], 0.0)
            se2 = jax.nn.sigmoid(
                jnp.dot(h2, w2b_ref[...], preferred_element_type=jnp.float32)
                + b2b_ref[...])
            scale_ref[...] = (se * se2)[:, :, None]                  # (bt, C, 1)

    @pl.when(p == 1)
    def _apply_pass():
        # Multiply in f32, downcast once on store (free: apply pass is HBM-bound).
        out_ref[...] = (x_ref[...].astype(jnp.float32)
                        * scale_ref[...]).astype(out_ref.dtype)


def _vmem_capacity_bytes():
    """Trace-time VMEM capacity query with a conservative (v7x per-TC) fallback."""
    try:
        info = pltpu.get_tpu_info()
        for attr in ("vmem_capacity_bytes", "vmem_bytes", "vmem_size_bytes"):
            v = getattr(info, attr, None)
            if v:
                return int(v)
    except Exception:
        pass
    return 64 << 20


def dse_forward(x_nchw, params):
    """x_nchw: (B, C, H, W). params: dict of layer1/layer2 1x1-conv weights & biases."""
    B, C, H, W = x_nchw.shape
    HW = H * W
    dtype = x_nchw.dtype

    w1a, b1a = params["w1a"], params["b1a"]
    w1b, b1b = params["w1b"], params["b1b"]
    w2a, b2a = params["w2a"], params["b2a"]
    w2b, b2b = params["w2b"], params["b2b"]
    Cm = w1a.shape[0]  # C // decay

    # Pre-transpose weights so the SE matmuls are (bt, C) @ (C, Cm) / (bt, Cm) @ (Cm, C).
    w1a_t = jnp.asarray(w1a.T, jnp.float32)
    w1b_t = jnp.asarray(w1b.T, jnp.float32)
    w2a_t = jnp.asarray(w2a.T, jnp.float32)
    w2b_t = jnp.asarray(w2b.T, jnp.float32)
    b1a_r = jnp.asarray(b1a.reshape(1, Cm), jnp.float32)
    b1b_r = jnp.asarray(b1b.reshape(1, C), jnp.float32)
    b2a_r = jnp.asarray(b2a.reshape(1, Cm), jnp.float32)
    b2b_r = jnp.asarray(b2b.reshape(1, C), jnp.float32)

    # ---- generation-aware tiling policy ----
    vmem_cap = _vmem_capacity_bytes()
    small_vmem = vmem_cap <= (64 << 20)          # v7x: 64 MiB / TC, 2 TensorCores
    if small_vmem:
        target_block_bytes = 10 << 20            # 4 x block + weights <= ~48 MiB
        vmem_cap_limit = 50 << 20
    else:
        target_block_bytes = 20 << 20            # v5e/v6e: 128 MiB physical VMEM
        vmem_cap_limit = 100 << 20

    itemsize = jnp.dtype(dtype).itemsize
    LANE = 128

    # Batch-block size.
    bt = min(8, B)
    if small_vmem:
        # Keep >= 2 batch blocks so both v7x TensorCores get work.
        if B > 1 and _cdiv(B, bt) < 2:
            bt = _cdiv(B, 2)
    else:
        # Single-TC chips: prefer a divisor of B (no ragged batch block, no wasted rows).
        if B % bt != 0:
            for cand in range(bt, 0, -1):
                if B % cand == 0:
                    bt = cand
                    break
    # Never let a single 128-lane slab exceed the block budget.
    while bt > 1 and bt * C * LANE * itemsize > target_block_bytes:
        bt = max(1, bt // 2)
    nb = _cdiv(B, bt)

    # Spatial tile: lane-aligned (multiple of 128), as large as the block budget allows.
    hw_lane = _cdiv(HW, LANE) * LANE
    per_lane_bytes = max(1, bt * C * itemsize)
    t_budget = max(LANE, (target_block_bytes // per_lane_bytes) // LANE * LANE)
    T = min(t_budget, hw_lane)
    nt = _cdiv(HW, T)

    block_bytes = bt * C * T * itemsize
    weight_bytes = 4 * C * Cm * 4 + 2 * (C + Cm) * 4
    vmem_limit = int(min(vmem_cap_limit,
                         max(16 << 20, 4 * block_bytes + weight_bytes + (4 << 20))))

    # No jnp.pad / output slice: Pallas masks ragged edge blocks on writeback; the
    # in-kernel mask handles the ragged last spatial tile for the reductions.
    x_flat = x_nchw.reshape(B, C, HW)

    kernel = functools.partial(_dse_kernel, hw_valid=HW, tile_hw=T,
                               num_tiles=nt, needs_mask=(HW % T != 0))

    def const_spec(shape):
        return pl.BlockSpec(shape, lambda b, p, t: (0, 0))

    # Pass 0 walks spatial tiles forward; pass 1 walks them in REVERSE so the last reduce
    # tile doubles as the first apply tile (block index unchanged -> no re-fetch).  Pass
    # 0's output block is pinned to that same (nt-1) block so no uninitialized buffer is
    # ever flushed at the pass boundary.
    x_spec = pl.BlockSpec((bt, C, T),
                          lambda b, p, t: (b, 0, t + p * (nt - 1 - 2 * t)))
    out_spec = pl.BlockSpec((bt, C, T),
                            lambda b, p, t: (b, 0, nt - 1 - p * t))

    out = pl.pallas_call(
        kernel,
        out_shape=jax.ShapeDtypeStruct((B, C, HW), dtype),
        grid_spec=pltpu.PrefetchScalarGridSpec(
            num_scalar_prefetch=0,
            grid=(nb, 2, nt),
            in_specs=[
                x_spec,                                                # x tiles
                const_spec((C, Cm)), const_spec((1, Cm)),              # layer1 conv1
                const_spec((Cm, C)), const_spec((1, C)),               # layer1 conv2
                const_spec((C, Cm)), const_spec((1, Cm)),              # layer2 conv1
                const_spec((Cm, C)), const_spec((1, C)),               # layer2 conv2
            ],
            out_specs=out_spec,
            scratch_shapes=[
                pltpu.VMEM((bt, C, 1), jnp.float32),   # running sum (keepdims layout)
                pltpu.VMEM((bt, C, 1), jnp.float32),   # running max (keepdims layout)
                pltpu.VMEM((bt, C, 1), jnp.float32),   # se * se2 scale
            ],
        ),
        compiler_params=pltpu.CompilerParams(
            dimension_semantics=("parallel", "arbitrary", "arbitrary"),
            vmem_limit_bytes=vmem_limit,
        ),
    )(x_flat, w1a_t, b1a_r, w1b_t, b1b_r, w2a_t, b2a_r, w2b_t, b2b_r)

    return out.reshape(B, C, H, W)


def init_dse_params(key, in_channel, decay=2):
    c, cm = in_channel, in_channel // decay
    ks = jax.random.split(key, 8)
    scale = 0.1
    return {
        # 1x1 conv weights (out, in, 1, 1) squeezed to (out, in); biases as (out, 1)
        "w1a": scale * jax.random.normal(ks[0], (cm, c), jnp.float32),
        "b1a": scale * jax.random.normal(ks[1], (cm, 1), jnp.float32),
        "w1b": scale * jax.random.normal(ks[2], (c, cm), jnp.float32),
        "b1b": scale * jax.random.normal(ks[3], (c, 1), jnp.float32),
        "w2a": scale * jax.random.normal(ks[4], (cm, c), jnp.float32),
        "b2a": scale * jax.random.normal(ks[5], (cm, 1), jnp.float32),
        "w2b": scale * jax.random.normal(ks[6], (c, cm), jnp.float32),
        "b2b": scale * jax.random.normal(ks[7], (c, 1), jnp.float32),
    }


def _dse_reference(x, p):
    # Pure-JAX reference mirroring the PyTorch forward (NCHW) exactly.
    gp = jnp.mean(x, axis=(2, 3), keepdims=True)            # (B, C, 1, 1)
    gp_v = gp[..., 0, 0]                                     # (B, C)
    h1 = jnp.maximum(gp_v @ p["w1a"].T + p["b1a"][:, 0], 0.0)
    se = jax.nn.sigmoid(h1 @ p["w1b"].T + p["b1b"][:, 0])    # (B, C)
    xs = x * se[:, :, None, None]
    gap = jnp.max(xs, axis=(2, 3))                           # (B, C)
    h2 = jnp.maximum(gap @ p["w2a"].T + p["b2a"][:, 0], 0.0)
    se2 = jax.nn.sigmoid(h2 @ p["w2b"].T + p["b2b"][:, 0])
    return xs * se2[:, :, None, None]


if __name__ == "__main__":
    key = jax.random.PRNGKey(0)
    k_x, k_p = jax.random.split(key)

    B, C, H, W = 2, 4, 16, 16  # H*W = 256 (lane-dim multiple of 128)
    x = jax.random.normal(k_x, (B, C, H, W), jnp.float32)
    params = init_dse_params(k_p, in_channel=C, decay=2)

    out = jax.block_until_ready(dse_forward(x, params))

    ref = _dse_reference(x, params)
    assert out.shape == (B, C, H, W)
    # out = x * (se*se2) vs reference (x*se)*se2 differ only by fp reassociation (~1 ulp).
    assert jnp.allclose(out, ref, atol=1e-5, rtol=1e-5), "mismatch vs reference"

    print("KERNEL_OK")
</pallas_src>

<mosaic_0001>
module attributes {stable_mosaic.version = 11 : i64} {
  func.func @_dse_kernel(%arg0: i32, %arg1: i32, %arg2: i32, %arg3: memref<1x4x256xf32, #tpu.memory_space<vmem>>, %arg4: memref<4x2xf32, #tpu.memory_space<vmem>>, %arg5: memref<1x2xf32, #tpu.memory_space<vmem>>, %arg6: memref<2x4xf32, #tpu.memory_space<vmem>>, %arg7: memref<1x4xf32, #tpu.memory_space<vmem>>, %arg8: memref<4x2xf32, #tpu.memory_space<vmem>>, %arg9: memref<1x2xf32, #tpu.memory_space<vmem>>, %arg10: memref<2x4xf32, #tpu.memory_space<vmem>>, %arg11: memref<1x4xf32, #tpu.memory_space<vmem>>, %arg12: memref<1x4x256xf32, #tpu.memory_space<vmem>>, %arg13: memref<1x4x1xf32, #tpu.memory_space<vmem>>, %arg14: memref<1x4x1xf32, #tpu.memory_space<vmem>>, %arg15: memref<1x4x1xf32, #tpu.memory_space<vmem>>) attributes {dimension_semantics = [#tpu.dimension_semantics<parallel>, #tpu.dimension_semantics<arbitrary>, #tpu.dimension_semantics<arbitrary>], iteration_bounds = array<i64: 2, 2, 1>, scalar_prefetch = 0 : i64, scratch_operands = 3 : i64, tpu.core_type = #tpu.core_type<tc>, window_params = [{transform_indices = @transform_0, window_bounds = array<i64: 1, 4, 256>}, {pipeline_mode = #tpu.pipeline_mode<synchronous>, transform_indices = @transform_1, window_bounds = array<i64: 4, 2>}, {pipeline_mode = #tpu.pipeline_mode<synchronous>, transform_indices = @transform_2, window_bounds = array<i64: 1, 2>}, {pipeline_mode = #tpu.pipeline_mode<synchronous>, transform_indices = @transform_3, window_bounds = array<i64: 2, 4>}, {pipeline_mode = #tpu.pipeline_mode<synchronous>, transform_indices = @transform_4, window_bounds = array<i64: 1, 4>}, {pipeline_mode = #tpu.pipeline_mode<synchronous>, transform_indices = @transform_5, window_bounds = array<i64: 4, 2>}, {pipeline_mode = #tpu.pipeline_mode<synchronous>, transform_indices = @transform_6, window_bounds = array<i64: 1, 2>}, {pipeline_mode = #tpu.pipeline_mode<synchronous>, transform_indices = @transform_7, window_bounds = array<i64: 2, 4>}, {pipeline_mode = #tpu.pipeline_mode<synchronous>, transform_indices = @transform_8, window_bounds = array<i64: 1, 4>}, {transform_indices = @transform_9, window_bounds = array<i64: 1, 4, 256>}]} {
    %c0_i32 = arith.constant 0 : i32
    %0 = arith.cmpi eq, %arg1, %c0_i32 : i32
    %1 = arith.extui %0 : i1 to i32
    %c0_i32_0 = arith.constant 0 : i32
    %2 = arith.cmpi ne, %1, %c0_i32_0 : i32
    scf.if %2 {
      %c0_i32_2 = arith.constant 0 : i32
      %6 = arith.cmpi eq, %arg2, %c0_i32_2 : i32
      %7 = arith.extui %6 : i1 to i32
      %c0_i32_3 = arith.constant 0 : i32
      %8 = arith.cmpi ne, %7, %c0_i32_3 : i32
      scf.if %8 {
        %cst = arith.constant 0.000000e+00 : f32
        %13 = vector.broadcast %cst : f32 to vector<1x4x1xf32>
        %c0_8 = arith.constant 0 : index
        %c0_9 = arith.constant 0 : index
        %c0_10 = arith.constant 0 : index
        %14 = vector.load %arg13[%c0_8, %c0_9, %c0_10] : memref<1x4x1xf32, #tpu.memory_space<vmem>>, vector<1x4x1xf32>
        tpu.vector_store %arg13[%c0_8, %c0_9, %c0_10], %13 {strides = array<i32>} : memref<1x4x1xf32, #tpu.memory_space<vmem>>, vector<1x4x1xf32>,
        %cst_11 = arith.constant 0xFF800000 : f32
        %15 = vector.broadcast %cst_11 : f32 to vector<1x4x1xf32>
        %c0_12 = arith.constant 0 : index
        %c0_13 = arith.constant 0 : index
        %c0_14 = arith.constant 0 : index
        %16 = vector.load %arg14[%c0_12, %c0_13, %c0_14] : memref<1x4x1xf32, #tpu.memory_space<vmem>>, vector<1x4x1xf32>
        tpu.vector_store %arg14[%c0_12, %c0_13, %c0_14], %15 {strides = array<i32>} : memref<1x4x1xf32, #tpu.memory_space<vmem>>, vector<1x4x1xf32>,
      } else {
      }
      %c0 = arith.constant 0 : index
      %c0_4 = arith.constant 0 : index
      %c0_5 = arith.constant 0 : index
      %9 = vector.load %arg3[%c0, %c0_4, %c0_5] : memref<1x4x256xf32, #tpu.memory_space<vmem>>, vector<1x4x256xf32>
      %c0_i32_6 = arith.constant 0 : i32
      %10 = arith.cmpi eq, %arg2, %c0_i32_6 : i32
      %11 = arith.extui %10 : i1 to i32
      %c0_i32_7 = arith.constant 0 : i32
      %12 = arith.cmpi ne, %11, %c0_i32_7 : i32
      scf.if %12 {
        %c0_8 = arith.constant 0 : index
        %c0_9 = arith.constant 0 : index
        %c0_10 = arith.constant 0 : index
        %13 = vector.load %arg13[%c0_8, %c0_9, %c0_10] : memref<1x4x1xf32, #tpu.memory_space<vmem>>, vector<1x4x1xf32>
        %cst = arith.constant dense<0.000000e+00> : vector<1x4xf32>
        %14 = vector.multi_reduction <add>, %9, %cst [2] : vector<1x4x256xf32> to vector<1x4xf32>
        %15 = vector.shape_cast %14 : vector<1x4xf32> to vector<1x4x1xf32>
        %16 = arith.addf %13, %15 : vector<1x4x1xf32>
        %c0_11 = arith.constant 0 : index
        %c0_12 = arith.constant 0 : index
        %c0_13 = arith.constant 0 : index
        %17 = vector.load %arg13[%c0_11, %c0_12, %c0_13] : memref<1x4x1xf32, #tpu.memory_space<vmem>>, vector<1x4x1xf32>
        tpu.vector_store %arg13[%c0_11, %c0_12, %c0_13], %16 {strides = array<i32>} : memref<1x4x1xf32, #tpu.memory_space<vmem>>, vector<1x4x1xf32>,
        %c0_14 = arith.constant 0 : index
        %c0_15 = arith.constant 0 : index
        %c0_16 = arith.constant 0 : index
        %18 = vector.load %arg14[%c0_14, %c0_15, %c0_16] : memref<1x4x1xf32, #tpu.memory_space<vmem>>, vector<1x4x1xf32>
        %cst_17 = arith.constant dense<0xFF800000> : vector<1x4xf32>
        %19 = vector.multi_reduction <maximumf>, %9, %cst_17 [2] : vector<1x4x256xf32> to vector<1x4xf32>
        %20 = vector.shape_cast %19 : vector<1x4xf32> to vector<1x4x1xf32>
        %21 = arith.maximumf %18, %20 : vector<1x4x1xf32>
        %c0_18 = arith.constant 0 : index
        %c0_19 = arith.constant 0 : index
        %c0_20 = arith.constant 0 : index
        %22 = vector.load %arg14[%c0_18, %c0_19, %c0_20] : memref<1x4x1xf32, #tpu.memory_space<vmem>>, vector<1x4x1xf32>
        tpu.vector_store %arg14[%c0_18, %c0_19, %c0_20], %21 {strides = array<i32>} : memref<1x4x1xf32, #tpu.memory_space<vmem>>, vector<1x4x1xf32>,
        %c0_21 = arith.constant 0 : index
        %c0_22 = arith.constant 0 : index
        %c0_23 = arith.constant 0 : index
        %23 = vector.load %arg13[%c0_21, %c0_22, %c0_23] : memref<1x4x1xf32, #tpu.memory_space<vmem>>, vector<1x4x1xf32>
        %cst_24 = arith.constant dense<0.000000e+00> : vector<1x4xf32>
        %24 = vector.multi_reduction <add>, %23, %cst_24 [2] : vector<1x4x1xf32> to vector<1x4xf32>
        %cst_25 = arith.constant 3.906250e-03 : f32
        %25 = vector.broadcast %cst_25 : f32 to vector<1x4xf32>
        %26 = arith.mulf %24, %25 : vector<1x4xf32>
        %c0_26 = arith.constant 0 : index
        %c0_27 = arith.constant 0 : index
        %c0_28 = arith.constant 0 : index
        %27 = vector.load %arg14[%c0_26, %c0_27, %c0_28] : memref<1x4x1xf32, #tpu.memory_space<vmem>>, vector<1x4x1xf32>
        %cst_29 = arith.constant dense<0xFF800000> : vector<1x4xf32>
        %28 = vector.multi_reduction <maximumf>, %27, %cst_29 [2] : vector<1x4x1xf32> to vector<1x4xf32>
        %c0_30 = arith.constant 0 : index
        %c0_31 = arith.constant 0 : index
        %29 = vector.load %arg4[%c0_30, %c0_31] : memref<4x2xf32, #tpu.memory_space<vmem>>, vector<4x2xf32>
        %cst_32 = arith.constant dense<0.000000e+00> : vector<1x2xf32>
        %30 = tpu.matmul %26, %29, %cst_32 {dimension_numbers = #tpu.dot_dimension_numbers<[1], [0], [0], [1], [0, 0, 1, 1], [], []>} : vector<1x4xf32>, vector<4x2xf32>, vector<1x2xf32> -> vector<1x2xf32>
        %c0_33 = arith.constant 0 : index
        %c0_34 = arith.constant 0 : index
        %31 = vector.load %arg5[%c0_33, %c0_34] : memref<1x2xf32, #tpu.memory_space<vmem>>, vector<1x2xf32>
        %32 = arith.addf %30, %31 : vector<1x2xf32>
        %cst_35 = arith.constant 0.000000e+00 : f32
        %33 = vector.broadcast %cst_35 : f32 to vector<1x2xf32>
        %34 = arith.maximumf %32, %33 : vector<1x2xf32>
        %c0_36 = arith.constant 0 : index
        %c0_37 = arith.constant 0 : index
        %35 = vector.load %arg6[%c0_36, %c0_37] : memref<2x4xf32, #tpu.memory_space<vmem>>, vector<2x4xf32>
        %cst_38 = arith.constant dense<0.000000e+00> : vector<1x4xf32>
        %36 = tpu.matmul %34, %35, %cst_38 {dimension_numbers = #tpu.dot_dimension_numbers<[1], [0], [0], [1], [0, 0, 1, 1], [], []>} : vector<1x2xf32>, vector<2x4xf32>, vector<1x4xf32> -> vector<1x4xf32>
        %c0_39 = arith.constant 0 : index
        %c0_40 = arith.constant 0 : index
        %37 = vector.load %arg7[%c0_39, %c0_40] : memref<1x4xf32, #tpu.memory_space<vmem>>, vector<1x4xf32>
        %38 = arith.addf %36, %37 : vector<1x4xf32>
        %39 = arith.negf %38 : vector<1x4xf32>
        %40 = math.exp %39 : vector<1x4xf32>
        %cst_41 = arith.constant 1.000000e+00 : f32
        %41 = vector.broadcast %cst_41 : f32 to vector<1x4xf32>
        %42 = arith.addf %41, %40 : vector<1x4xf32>
        %43 = arith.divf %41, %42 : vector<1x4xf32>
        %44 = arith.mulf %43, %28 : vector<1x4xf32>
        %c0_42 = arith.constant 0 : index
        %c0_43 = arith.constant 0 : index
        %45 = vector.load %arg8[%c0_42, %c0_43] : memref<4x2xf32, #tpu.memory_space<vmem>>, vector<4x2xf32>
        %cst_44 = arith.constant dense<0.000000e+00> : vector<1x2xf32>
        %46 = tpu.matmul %44, %45, %cst_44 {dimension_numbers = #tpu.dot_dimension_numbers<[1], [0], [0], [1], [0, 0, 1, 1], [], []>} : vector<1x4xf32>, vector<4x2xf32>, vector<1x2xf32> -> vector<1x2xf32>
        %c0_45 = arith.constant 0 : index
        %c0_46 = arith.constant 0 : index
        %47 = vector.load %arg9[%c0_45, %c0_46] : memref<1x2xf32, #tpu.memory_space<vmem>>, vector<1x2xf32>
        %48 = arith.addf %46, %47 : vector<1x2xf32>
        %cst_47 = arith.constant 0.000000e+00 : f32
        %49 = vector.broadcast %cst_47 : f32 to vector<1x2xf32>
        %50 = arith.maximumf %48, %49 : vector<1x2xf32>
        %c0_48 = arith.constant 0 : index
        %c0_49 = arith.constant 0 : index
        %51 = vector.load %arg10[%c0_48, %c0_49] : memref<2x4xf32, #tpu.memory_space<vmem>>, vector<2x4xf32>
        %cst_50 = arith.constant dense<0.000000e+00> : vector<1x4xf32>
        %52 = tpu.matmul %50, %51, %cst_50 {dimension_numbers = #tpu.dot_dimension_numbers<[1], [0], [0], [1], [0, 0, 1, 1], [], []>} : vector<1x2xf32>, vector<2x4xf32>, vector<1x4xf32> -> vector<1x4xf32>
        %c0_51 = arith.constant 0 : index
        %c0_52 = arith.constant 0 : index
        %53 = vector.load %arg11[%c0_51, %c0_52] : memref<1x4xf32, #tpu.memory_space<vmem>>, vector<1x4xf32>
        %54 = arith.addf %52, %53 : vector<1x4xf32>
        %55 = arith.negf %54 : vector<1x4xf32>
        %56 = math.exp %55 : vector<1x4xf32>
        %cst_53 = arith.constant 1.000000e+00 : f32
        %57 = vector.broadcast %cst_53 : f32 to vector<1x4xf32>
        %58 = arith.addf %57, %56 : vector<1x4xf32>
        %59 = arith.divf %57, %58 : vector<1x4xf32>
        %60 = arith.mulf %43, %59 : vector<1x4xf32>
        %61 = vector.shape_cast %60 : vector<1x4xf32> to vector<1x4x1xf32>
        %c0_54 = arith.constant 0 : index
        %c0_55 = arith.constant 0 : index
        %c0_56 = arith.constant 0 : index
        %62 = vector.load %arg15[%c0_54, %c0_55, %c0_56] : memref<1x4x1xf32, #tpu.memory_space<vmem>>, vector<1x4x1xf32>
        tpu.vector_store %arg15[%c0_54, %c0_55, %c0_56], %61 {strides = array<i32>} : memref<1x4x1xf32, #tpu.memory_space<vmem>>, vector<1x4x1xf32>,
      } else {
      }
    } else {
    }
    %c1_i32 = arith.constant 1 : i32
    %3 = arith.cmpi eq, %arg1, %c1_i32 : i32
    %4 = arith.extui %3 : i1 to i32
    %c0_i32_1 = arith.constant 0 : i32
    %5 = arith.cmpi ne, %4, %c0_i32_1 : i32
    scf.if %5 {
      %c0 = arith.constant 0 : index
      %c0_2 = arith.constant 0 : index
      %c0_3 = arith.constant 0 : index
      %6 = vector.load %arg3[%c0, %c0_2, %c0_3] : memref<1x4x256xf32, #tpu.memory_space<vmem>>, vector<1x4x256xf32>
      %c0_4 = arith.constant 0 : index
      %c0_5 = arith.constant 0 : index
      %c0_6 = arith.constant 0 : index
      %7 = vector.load %arg15[%c0_4, %c0_5, %c0_6] : memref<1x4x1xf32, #tpu.memory_space<vmem>>, vector<1x4x1xf32>
      %8 = vector.broadcast %7 : vector<1x4x1xf32> to vector<1x4x256xf32>
      %9 = arith.mulf %6, %8 : vector<1x4x256xf32>
      %c0_7 = arith.constant 0 : index
      %c0_8 = arith.constant 0 : index
      %c0_9 = arith.constant 0 : index
      %10 = vector.load %arg12[%c0_7, %c0_8, %c0_9] : memref<1x4x256xf32, #tpu.memory_space<vmem>>, vector<1x4x256xf32>
      tpu.vector_store %arg12[%c0_7, %c0_8, %c0_9], %9 {strides = array<i32>} : memref<1x4x256xf32, #tpu.memory_space<vmem>>, vector<1x4x256xf32>,
    } else {
    }
    return
  }
  func.func @transform_0(%arg0: i32, %arg1: i32, %arg2: i32) -> (i32, i32, i32) {
    %c2_i32 = arith.constant 2 : i32
    %0 = arith.muli %c2_i32, %arg2 : i32
    %c0_i32 = arith.constant 0 : i32
    %1 = arith.subi %c0_i32, %0 : i32
    %2 = arith.muli %arg1, %1 : i32
    %3 = arith.addi %arg2, %2 : i32
    %c0_i32_0 = arith.constant 0 : i32
    %c0_i32_1 = arith.constant 0 : i32
    return %arg0, %c0_i32_0, %3 : i32, i32, i32
  }
  func.func @transform_1(%arg0: i32, %arg1: i32, %arg2: i32) -> (i32, i32) {
    %c0_i32 = arith.constant 0 : i32
    %c0_i32_0 = arith.constant 0 : i32
    %c0_i32_1 = arith.constant 0 : i32
    return %c0_i32, %c0_i32_0 : i32, i32
  }
  func.func @transform_2(%arg0: i32, %arg1: i32, %arg2: i32) -> (i32, i32) {
    %c0_i32 = arith.constant 0 : i32
    %c0_i32_0 = arith.constant 0 : i32
    %c0_i32_1 = arith.constant 0 : i32
    return %c0_i32, %c0_i32_0 : i32, i32
  }
  func.func @transform_3(%arg0: i32, %arg1: i32, %arg2: i32) -> (i32, i32) {
    %c0_i32 = arith.constant 0 : i32
    %c0_i32_0 = arith.constant 0 : i32
    %c0_i32_1 = arith.constant 0 : i32
    return %c0_i32, %c0_i32_0 : i32, i32
  }
  func.func @transform_4(%arg0: i32, %arg1: i32, %arg2: i32) -> (i32, i32) {
    %c0_i32 = arith.constant 0 : i32
    %c0_i32_0 = arith.constant 0 : i32
    %c0_i32_1 = arith.constant 0 : i32
    return %c0_i32, %c0_i32_0 : i32, i32
  }
  func.func @transform_5(%arg0: i32, %arg1: i32, %arg2: i32) -> (i32, i32) {
    %c0_i32 = arith.constant 0 : i32
    %c0_i32_0 = arith.constant 0 : i32
    %c0_i32_1 = arith.constant 0 : i32
    return %c0_i32, %c0_i32_0 : i32, i32
  }
  func.func @transform_6(%arg0: i32, %arg1: i32, %arg2: i32) -> (i32, i32) {
    %c0_i32 = arith.constant 0 : i32
    %c0_i32_0 = arith.constant 0 : i32
    %c0_i32_1 = arith.constant 0 : i32
    return %c0_i32, %c0_i32_0 : i32, i32
  }
  func.func @transform_7(%arg0: i32, %arg1: i32, %arg2: i32) -> (i32, i32) {
    %c0_i32 = arith.constant 0 : i32
    %c0_i32_0 = arith.constant 0 : i32
    %c0_i32_1 = arith.constant 0 : i32
    return %c0_i32, %c0_i32_0 : i32, i32
  }
  func.func @transform_8(%arg0: i32, %arg1: i32, %arg2: i32) -> (i32, i32) {
    %c0_i32 = arith.constant 0 : i32
    %c0_i32_0 = arith.constant 0 : i32
    %c0_i32_1 = arith.constant 0 : i32
    return %c0_i32, %c0_i32_0 : i32, i32
  }
  func.func @transform_9(%arg0: i32, %arg1: i32, %arg2: i32) -> (i32, i32, i32) {
    %0 = arith.muli %arg1, %arg2 : i32
    %c0_i32 = arith.constant 0 : i32
    %1 = arith.subi %c0_i32, %0 : i32
    %c0_i32_0 = arith.constant 0 : i32
    %c0_i32_1 = arith.constant 0 : i32
    return %arg0, %c0_i32_0, %1 : i32, i32, i32
  }
}

</mosaic_0001>

<llo_original>
// kernel: tpu_custom_call.1
$region0: #{tpu_custom_call.1}
  #allocation0 [shape = 'u32[]', space=smem, size = 0x4, offset = 0x4, fixed_abs, tag = 'smem constant byte address 0x4 - core index']
  #allocation1 [shape = 'u32[144,128]{1,0:T(1,128)}', space=vmem, size = 0x12000, scoped, tag = 'internal scratch']
  #allocation2 [shape = 'f32[1,4,1]{2,1,0:T(4,128)}', space=vmem, size = 0x800, scoped, tag = 'scratch operand']
  #allocation3 [shape = 'f32[1,4,1]{2,1,0:T(4,128)}', space=vmem, size = 0x800, scoped, tag = 'scratch operand']
  #allocation4 [shape = 'f32[1,4,1]{2,1,0:T(4,128)}', space=vmem, size = 0x800, scoped, tag = 'scratch operand']
  %s0 = inlined_call_operand.hbm [shape: f32[2,4,256], index: 0, kind: input, shape index: {}]
  %s1 = inlined_call_operand.vmem [shape: f32[4,2], index: 1, kind: input, shape index: {}]
  %s2 = inlined_call_operand.vmem [shape: f32[1,2], index: 2, kind: input, shape index: {}]
  %s3 = inlined_call_operand.vmem [shape: f32[2,4], index: 3, kind: input, shape index: {}]
  %s4 = inlined_call_operand.vmem [shape: f32[1,4], index: 4, kind: input, shape index: {}]
  %s5 = inlined_call_operand.vmem [shape: f32[4,2], index: 5, kind: input, shape index: {}]
  %s6 = inlined_call_operand.vmem [shape: f32[1,2], index: 6, kind: input, shape index: {}]
  %s7 = inlined_call_operand.vmem [shape: f32[2,4], index: 7, kind: input, shape index: {}]
  %s8 = inlined_call_operand.vmem [shape: f32[1,4], index: 8, kind: input, shape index: {}]
  %s9 = inlined_call_operand.hbm [shape: f32[2,4,256], index: 9, kind: output, shape index: {}]
  %s10 = sld [smem:[#allocation0]]
  $region89: #{tpu_custom_call.1} parent=0
    _
  %s12 = ssub.s32 1, %s10
  %s13 = scalar_select 0, %s12, %s10
  $region1: #{tpu_custom_call.1} parent=0
    #allocation5 [shape = 'u8[8192]{0}', space=vmem, size = 0x2000, scoped, tag = 'input window, operand 0']
    #allocation6 [shape = 's32[2]{0}', space=sflag, size = 0x8, scoped, tag = 'scoped memory for tpu_custom_call.1']
    #allocation7 [shape = 's32[2]{0}', space=sflag, size = 0x8, scoped, tag = 'scoped memory for tpu_custom_call.1']
    #allocation8 [shape = 'u8[8192]{0}', space=vmem, size = 0x2000, scoped, tag = 'output window, operand 0']
    %14 = vsyncpa [#allocation6], 0
    %s15 = scalar_lea.sflag [#allocation6], 1
    %16 = vsyncpa %s15, 0
    %17 = vsyncpa [#allocation7], 0
    %s18 = scalar_lea.sflag [#allocation7], 1
    %19 = vsyncpa %s18, 0
    loop: start=0, step=1, limit=6
    $region2: #{tpu_custom_call.1} parent=1 // loop_pre_header
      _
    $region3: #{tpu_custom_call.1} parent=1 // loop_header
      %s21 = sphi 0, %s25
      %p22 = scmp.ge.s32.totalorder %s21, 6
      %s28 = sphi 0, %s47
      %s29 = sphi 0, %s43
      %s30 = sphi 0, %s39
      %s31 = sphi 0, %s28
      %s32 = sphi 0, %s29
      %s33 = sphi 0, %s30
      %s34 = sphi 0, %s31
      %s35 = sphi 0, %s32
      %s36 = sphi 0, %s33
      %s60 = sphi 0, %s62
      %s63 = sphi 0, %s60
      %s64 = sphi 0, %s63
      %s80 = sphi 0, %s64
      %s84 = sphi 0, %s84
      %s86 = sphi 0, %s84
      %s87 = sphi 0, %s86
      %s101 = sphi 0, %s87
      %s105 = sphi 0, %s105
      %s107 = sphi 0, %s105
      %s108 = sphi 0, %s107
      %s122 = sphi 0, %s108
      %s126 = sphi 0, %s126
      %s128 = sphi 0, %s126
      %s129 = sphi 0, %s128
      %s143 = sphi 0, %s129
      %s147 = sphi 0, %s147
      %s149 = sphi 0, %s147
      %s150 = sphi 0, %s149
      %s164 = sphi 0, %s150
      %s168 = sphi 0, %s168
      %s170 = sphi 0, %s168
      %s171 = sphi 0, %s170
      %s185 = sphi 0, %s171
      %s189 = sphi 0, %s189
      %s191 = sphi 0, %s189
      %s192 = sphi 0, %s191
      %s206 = sphi 0, %s192
      %s210 = sphi 0, %s210
      %s212 = sphi 0, %s210
      %s213 = sphi 0, %s212
      %s227 = sphi 0, %s213
      %s231 = sphi 0, %s231
      %s233 = sphi 0, %s231
      %s234 = sphi 0, %s233
      %s248 = sphi 0, %s234
      %s260 = sphi 0, %s262
      %s263 = sphi 0, %s260
      %s264 = sphi 0, %s263
      %s280 = sphi 0, %s264
    $region4: #{tpu_custom_call.1} parent=1 // loop_header_branch
      %24 = sbr.rel (%p22) target = $region8
    $region5: #{tpu_custom_call.1} parent=1 // loop_body
      %s26 = ssub.s32 %s21, 1
      %s27 = ssub.s32 %s21, 2
      %s37 = sadd.s32 1, %s30
      %p38 = scmp.ge.s32.totalorder %s37, 1
      %s39 = scalar_select %p38, 0, %s37
      %s40 = sadd.s32 1, %s29
      %s41 = scalar_select %p38, %s40, %s29
      %p42 = scmp.ge.s32.totalorder %s41, 2
      %s43 = scalar_select %p42, 0, %s41
      %s44 = sadd.s32 1, %s28
      %s45 = scalar_select %p42, %s44, %s28
      %p46 = scmp.ge.s32.totalorder %s45, 2
      %s47 = scalar_select %p46, 0, %s45
      %s48 = smul.u32 %s30, 2
      %s49 = ssub.s32 0, %s48
      %s50 = smul.u32 %s29, %s49
      %s51 = sadd.s32 %s30, %s50
      %s52 = smul.u32 %s39, 2
      %s53 = ssub.s32 0, %s52
      %s54 = smul.u32 %s43, %s53
      %s55 = sadd.s32 %s39, %s54
      %s56 = ssub.s32 %s28, %s47
      %s57 = ssub.s32 %s51, %s55
      %s58 = sor.u32 %s56, %s57
      %p59 = scmp.eq.s32.totalorder %s58, 0
      %s61 = sadd.s32 %s60, 1
      %s62 = scalar_select %p59, %s60, %s61
      %p65 = pneg %p59
      %p66 = scmp.eq.s32.totalorder %s21, 3
      %p67 = por %p65, %p66
      %p68 = scmp.ne.s32.totalorder %s60, %s63
      %p69 = scmp.eq.s32.totalorder %s21, 0
      %p70 = por %p68, %p69
      %p71 = scmp.ne.s32.totalorder %s60, %s63
      %p72 = scmp.eq.s32.totalorder %s26, 3
      %p73 = por %p71, %p72
      %p74 = scmp.ne.s32.totalorder %s63, %s64
      %p75 = scmp.eq.s32.totalorder %s26, 0
      %p76 = por %p74, %p75
      %p77 = scmp.ne.s32.totalorder %s63, %s64
      %p78 = scmp.eq.s32.totalorder %s27, 3
      %p79 = por %p77, %p78
      %p81 = scmp.ne.s32.totalorder %s64, %s80
      %p82 = scmp.eq.s32.totalorder %s27, 0
      %p83 = por %p81, %p82
      %s85 = sadd.s32 %s84, 1
      %p88 = scmp.eq.s32.totalorder %s21, 3
      %p89 = scmp.ne.s32.totalorder %s84, %s86
      %p90 = scmp.eq.s32.totalorder %s21, 0
      %p91 = por %p89, %p90
      %p92 = scmp.ne.s32.totalorder %s84, %s86
      %p93 = scmp.eq.s32.totalorder %s26, 3
      %p94 = por %p92, %p93
      %p95 = scmp.ne.s32.totalorder %s86, %s87
      %p96 = scmp.eq.s32.totalorder %s26, 0
      %p97 = por %p95, %p96
      %p98 = scmp.ne.s32.totalorder %s86, %s87
      %p99 = scmp.eq.s32.totalorder %s27, 3
      %p100 = por %p98, %p99
      %p102 = scmp.ne.s32.totalorder %s87, %s101
      %p103 = scmp.eq.s32.totalorder %s27, 0
      %p104 = por %p102, %p103
      %s106 = sadd.s32 %s105, 1
      %p109 = scmp.eq.s32.totalorder %s21, 3
      %p110 = scmp.ne.s32.totalorder %s105, %s107
      %p111 = scmp.eq.s32.totalorder %s21, 0
      %p112 = por %p110, %p111
      %p113 = scmp.ne.s32.totalorder %s105, %s107
      %p114 = scmp.eq.s32.totalorder %s26, 3
      %p115 = por %p113, %p114
      %p116 = scmp.ne.s32.totalorder %s107, %s108
      %p117 = scmp.eq.s32.totalorder %s26, 0
      %p118 = por %p116, %p117
      %p119 = scmp.ne.s32.totalorder %s107, %s108
      %p120 = scmp.eq.s32.totalorder %s27, 3
      %p121 = por %p119, %p120
      %p123 = scmp.ne.s32.totalorder %s108, %s122
      %p124 = scmp.eq.s32.totalorder %s27, 0
      %p125 = por %p123, %p124
      %s127 = sadd.s32 %s126, 1
      %p130 = scmp.eq.s32.totalorder %s21, 3
      %p131 = scmp.ne.s32.totalorder %s126, %s128
      %p132 = scmp.eq.s32.totalorder %s21, 0
      %p133 = por %p131, %p132
      %p134 = scmp.ne.s32.totalorder %s126, %s128
      %p135 = scmp.eq.s32.totalorder %s26, 3
      %p136 = por %p134, %p135
      %p137 = scmp.ne.s32.totalorder %s128, %s129
      %p138 = scmp.eq.s32.totalorder %s26, 0
      %p139 = por %p137, %p138
      %p140 = scmp.ne.s32.totalorder %s128, %s129
      %p141 = scmp.eq.s32.totalorder %s27, 3
      %p142 = por %p140, %p141
      %p144 = scmp.ne.s32.totalorder %s129, %s143
      %p145 = scmp.eq.s32.totalorder %s27, 0
      %p146 = por %p144, %p145
      %s148 = sadd.s32 %s147, 1
      %p151 = scmp.eq.s32.totalorder %s21, 3
      %p152 = scmp.ne.s32.totalorder %s147, %s149
      %p153 = scmp.eq.s32.totalorder %s21, 0
      %p154 = por %p152, %p153
      %p155 = scmp.ne.s32.totalorder %s147, %s149
      %p156 = scmp.eq.s32.totalorder %s26, 3
      %p157 = por %p155, %p156
      %p158 = scmp.ne.s32.totalorder %s149, %s150
      %p159 = scmp.eq.s32.totalorder %s26, 0
      %p160 = por %p158, %p159
      %p161 = scmp.ne.s32.totalorder %s149, %s150
      %p162 = scmp.eq.s32.totalorder %s27, 3
      %p163 = por %p161, %p162
      %p165 = scmp.ne.s32.totalorder %s150, %s164
      %p166 = scmp.eq.s32.totalorder %s27, 0
      %p167 = por %p165, %p166
      %s169 = sadd.s32 %s168, 1
      %p172 = scmp.eq.s32.totalorder %s21, 3
      %p173 = scmp.ne.s32.totalorder %s168, %s170
      %p174 = scmp.eq.s32.totalorder %s21, 0
      %p175 = por %p173, %p174
      %p176 = scmp.ne.s32.totalorder %s168, %s170
      %p177 = scmp.eq.s32.totalorder %s26, 3
      %p178 = por %p176, %p177
      %p179 = scmp.ne.s32.totalorder %s170, %s171
      %p180 = scmp.eq.s32.totalorder %s26, 0
      %p181 = por %p179, %p180
      %p182 = scmp.ne.s32.totalorder %s170, %s171
      %p183 = scmp.eq.s32.totalorder %s27, 3
      %p184 = por %p182, %p183
      %p186 = scmp.ne.s32.totalorder %s171, %s185
      %p187 = scmp.eq.s32.totalorder %s27, 0
      %p188 = por %p186, %p187
      %s190 = sadd.s32 %s189, 1
      %p193 = scmp.eq.s32.totalorder %s21, 3
      %p194 = scmp.ne.s32.totalorder %s189, %s191
      %p195 = scmp.eq.s32.totalorder %s21, 0
      %p196 = por %p194, %p195
      %p197 = scmp.ne.s32.totalorder %s189, %s191
      %p198 = scmp.eq.s32.totalorder %s26, 3
      %p199 = por %p197, %p198
      %p200 = scmp.ne.s32.totalorder %s191, %s192
      %p201 = scmp.eq.s32.totalorder %s26, 0
      %p202 = por %p200, %p201
      %p203 = scmp.ne.s32.totalorder %s191, %s192
      %p204 = scmp.eq.s32.totalorder %s27, 3
      %p205 = por %p203, %p204
      %p207 = scmp.ne.s32.totalorder %s192, %s206
      %p208 = scmp.eq.s32.totalorder %s27, 0
      %p209 = por %p207, %p208
      %s211 = sadd.s32 %s210, 1
      %p214 = scmp.eq.s32.totalorder %s21, 3
      %p215 = scmp.ne.s32.totalorder %s210, %s212
      %p216 = scmp.eq.s32.totalorder %s21, 0
      %p217 = por %p215, %p216
      %p218 = scmp.ne.s32.totalorder %s210, %s212
      %p219 = scmp.eq.s32.totalorder %s26, 3
      %p220 = por %p218, %p219
      %p221 = scmp.ne.s32.totalorder %s212, %s213
      %p222 = scmp.eq.s32.totalorder %s26, 0
      %p223 = por %p221, %p222
      %p224 = scmp.ne.s32.totalorder %s212, %s213
      %p225 = scmp.eq.s32.totalorder %s27, 3
      %p226 = por %p224, %p225
      %p228 = scmp.ne.s32.totalorder %s213, %s227
      %p229 = scmp.eq.s32.totalorder %s27, 0
      %p230 = por %p228, %p229
      %s232 = sadd.s32 %s231, 1
      %p235 = scmp.eq.s32.totalorder %s21, 3
      %p236 = scmp.ne.s32.totalorder %s231, %s233
      %p237 = scmp.eq.s32.totalorder %s21, 0
      %p238 = por %p236, %p237
      %p239 = scmp.ne.s32.totalorder %s231, %s233
      %p240 = scmp.eq.s32.totalorder %s26, 3
      %p241 = por %p239, %p240
      %p242 = scmp.ne.s32.totalorder %s233, %s234
      %p243 = scmp.eq.s32.totalorder %s26, 0
      %p244 = por %p242, %p243
      %p245 = scmp.ne.s32.totalorder %s233, %s234
      %p246 = scmp.eq.s32.totalorder %s27, 3
      %p247 = por %p245, %p246
      %p249 = scmp.ne.s32.totalorder %s234, %s248
      %p250 = scmp.eq.s32.totalorder %s27, 0
      %p251 = por %p249, %p250
      %s252 = smul.u32 %s29, %s30
      %s253 = ssub.s32 0, %s252
      %s254 = smul.u32 %s43, %s39
      %s255 = ssub.s32 0, %s254
      %s256 = ssub.s32 %s28, %s47
      %s257 = ssub.s32 %s253, %s255
      %s258 = sor.u32 %s256, %s257
      %p259 = scmp.eq.s32.totalorder %s258, 0
      %s261 = sadd.s32 %s260, 1
      %s262 = scalar_select %p259, %s260, %s261
      %p265 = pneg %p259
      %p266 = scmp.eq.s32.totalorder %s21, 3
      %p267 = por %p265, %p266
      %p268 = scmp.ne.s32.totalorder %s260, %s263
      %p269 = scmp.eq.s32.totalorder %s21, 0
      %p270 = por %p268, %p269
      %p271 = scmp.ne.s32.totalorder %s260, %s263
      %p272 = scmp.eq.s32.totalorder %s26, 3
      %p273 = por %p271, %p272
      %p274 = scmp.ne.s32.totalorder %s263, %s264
      %p275 = scmp.eq.s32.totalorder %s26, 0
      %p276 = por %p274, %p275
      %p277 = scmp.ne.s32.totalorder %s263, %s264
      %p278 = scmp.eq.s32.totalorder %s27, 3
      %p279 = por %p277, %p278
      %p281 = scmp.ne.s32.totalorder %s264, %s280
      %p282 = scmp.eq.s32.totalorder %s27, 0
      %p283 = por %p281, %p282
      %p284 = scmp.le.s32.totalorder 1, %s21
      %p285 = scmp.lt.s32.totalorder %s21, 5
      %p286 = pnand %p284, %p285
      %p287 = pneg %p286
      // Predicated region
      $region9: #{tpu_custom_call.1} parent=5 // pred_check
        _
      $region10: #{tpu_custom_call.1} parent=5 // pred_check_branch
        %289 = sbr.rel (%p286) target = $region12
      $region11: #{tpu_custom_call.1} parent=5 // pred_region
        %s290 = ssub.s32 %s21, 1
        // Predicated region
        $region13: #{tpu_custom_call.1} parent=11 // pred_check
          %p291 = pneg %p97
        $region14: #{tpu_custom_call.1} parent=11 // pred_check_branch
          %293 = sbr.rel (%p291) target = $region16
        $region15: #{tpu_custom_call.1} parent=11 // pred_region
          _
        $region16: #{tpu_custom_call.1} parent=11 // pred_fallthru
          _
        // Predicated region
        $region17: #{tpu_custom_call.1} parent=11 // pred_check
          %p294 = pneg %p118
        $region18: #{tpu_custom_call.1} parent=11 // pred_check_branch
          %296 = sbr.rel (%p294) target = $region20
        $region19: #{tpu_custom_call.1} parent=11 // pred_region
          _
        $region20: #{tpu_custom_call.1} parent=11 // pred_fallthru
          _
        // Predicated region
        $region21: #{tpu_custom_call.1} parent=11 // pred_check
          %p297 = pneg %p139
        $region22: #{tpu_custom_call.1} parent=11 // pred_check_branch
          %299 = sbr.rel (%p297) target = $region24
        $region23: #{tpu_custom_call.1} parent=11 // pred_region
          _
        $region24: #{tpu_custom_call.1} parent=11 // pred_fallthru
          _
        // Predicated region
        $region25: #{tpu_custom_call.1} parent=11 // pred_check
          %p300 = pneg %p160
        $region26: #{tpu_custom_call.1} parent=11 // pred_check_branch
          %302 = sbr.rel (%p300) target = $region28
        $region27: #{tpu_custom_call.1} parent=11 // pred_region
          _
        $region28: #{tpu_custom_call.1} parent=11 // pred_fallthru
          _
        // Predicated region
        $region29: #{tpu_custom_call.1} parent=11 // pred_check
          %p303 = pneg %p181
        $region30: #{tpu_custom_call.1} parent=11 // pred_check_branch
          %305 = sbr.rel (%p303) target = $region32
        $region31: #{tpu_custom_call.1} parent=11 // pred_region
          _
        $region32: #{tpu_custom_call.1} parent=11 // pred_fallthru
          _
        // Predicated region
        $region33: #{tpu_custom_call.1} parent=11 // pred_check
          %p306 = pneg %p202
        $region34: #{tpu_custom_call.1} parent=11 // pred_check_branch
          %308 = sbr.rel (%p306) target = $region36
        $region35: #{tpu_custom_call.1} parent=11 // pred_region
          _
        $region36: #{tpu_custom_call.1} parent=11 // pred_fallthru
          _
        // Predicated region
        $region37: #{tpu_custom_call.1} parent=11 // pred_check
          %p309 = pneg %p223
        $region38: #{tpu_custom_call.1} parent=11 // pred_check_branch
          %311 = sbr.rel (%p309) target = $region40
        $region39: #{tpu_custom_call.1} parent=11 // pred_region
          _
        $region40: #{tpu_custom_call.1} parent=11 // pred_fallthru
          _
        // Predicated region
        $region41: #{tpu_custom_call.1} parent=11 // pred_check
          %p312 = pneg %p244
        $region42: #{tpu_custom_call.1} parent=11 // pred_check_branch
          %314 = sbr.rel (%p312) target = $region44
        $region43: #{tpu_custom_call.1} parent=11 // pred_region
          _
        $region44: #{tpu_custom_call.1} parent=11 // pred_fallthru
          _
      $region12: #{tpu_custom_call.1} parent=5 // pred_fallthru
        _
      %p315 = scmp.lt.s32.totalorder %s21, 4
      // Predicated region
      $region45: #{tpu_custom_call.1} parent=5 // pred_check
        %p316 = pneg %p315
      $region46: #{tpu_custom_call.1} parent=5 // pred_check_branch
        %318 = sbr.rel (%p316) target = $region48
      $region47: #{tpu_custom_call.1} parent=5 // pred_region
        // Predicated region
        $region49: #{tpu_custom_call.1} parent=47 // pred_check
          %p319 = pneg %p70
        $region50: #{tpu_custom_call.1} parent=47 // pred_check_branch
          %321 = sbr.rel (%p319) target = $region52
        $region51: #{tpu_custom_call.1} parent=47 // pred_region
          %s322 = sand.u32 %s60, 1
          %s323 = scalar_lea.sflag [#allocation6], %s322
          %s324 = sand.u32 %s60, 1
          %s325 = smul.addr %s324, 8
          %s326 = scalar_lea.vmem [#allocation5], %s325
          %s327 = smul.u32 %s30, 2
          %s328 = ssub.s32 0, %s327
          %s329 = smul.u32 %s29, %s328
          %s330 = sadd.s32 %s30, %s329
          %s331 = smul.u32 2, %s330
          %s333 = ssub.s32 128, 128
          %334 = vsyncadd %s323, %s333
          %s335 = smul.addr %s28, 2
          %s336 = sadd.s32 %s331, %s335
          %s337 = smul.addr %s336, 64
          %s338 = scalar_lea.hbm %s0, %s337
          %s340 = sshll.u32 %s326, 4
          %s341 = int_to_ptr.vmem [resolvable:$true] %s340
          %343 = dma.hbm_to_vmem [thread:$0]  %s338, 128, %s341, %s323
        $region52: #{tpu_custom_call.1} parent=47 // pred_fallthru
          _
      $region48: #{tpu_custom_call.1} parent=5 // pred_fallthru
        _
      %p344 = scmp.le.s32.totalorder 1, %s21
      %p345 = scmp.lt.s32.totalorder %s21, 5
      %p346 = pnand %p344, %p345
      %p347 = pneg %p346
      // Predicated region
      $region53: #{tpu_custom_call.1} parent=5 // pred_check
        _
      $region54: #{tpu_custom_call.1} parent=5 // pred_check_branch
        %349 = sbr.rel (%p346) target = $region56
      $region55: #{tpu_custom_call.1} parent=5 // pred_region
        %s350 = ssub.s32 %s21, 1
        %s351 = sand.u32 %s63, 1
        %s352 = scalar_lea.sflag [#allocation6], %s351
        %s353 = sand.u32 %s63, 1
        %s354 = smul.addr %s353, 8
        %s355 = scalar_lea.vmem [#allocation5], %s354
        // Predicated region
        $region57: #{tpu_custom_call.1} parent=55 // pred_check
          %p356 = pneg %p76
        $region58: #{tpu_custom_call.1} parent=55 // pred_check_branch
          %358 = sbr.rel (%p356) target = $region60
        $region59: #{tpu_custom_call.1} parent=55 // pred_region
          %359 = dma.done %s352, 128
        $region60: #{tpu_custom_call.1} parent=55 // pred_fallthru
          _
        %s360 = sand.u32 %s63, 1
        %s361 = scalar_lea.sflag [#allocation6], %s360
        %s362 = sand.u32 %s63, 1
        %s363 = smul.addr %s362, 8
        %s364 = scalar_lea.vmem [#allocation5], %s363
        %p365 = pneg %p76
        %p366 = pneg %p73
        %p367 = pneg %p97
        %p368 = pneg %p94
        %p369 = pneg %p118
        %p370 = pneg %p115
        %p371 = pneg %p139
        %p372 = pneg %p136
        %p373 = pneg %p160
        %p374 = pneg %p157
        %p375 = pneg %p181
        %p376 = pneg %p178
        %p377 = pneg %p202
        %p378 = pneg %p199
        %p379 = pneg %p223
        %p380 = pneg %p220
        %p381 = pneg %p244
        %p382 = pneg %p241
        %p383 = pneg %p276
        %p384 = pneg %p273
        %s385 = sand.u32 %s263, 1
        %s386 = scalar_lea.sflag [#allocation7], %s385
        %s387 = sand.u32 %s263, 1
        %s388 = smul.addr %s387, 8
        %s389 = scalar_lea.vmem [#allocation8], %s388
        %s390 = smul.u32 %s33, 2
        %s391 = ssub.s32 0, %s390
        %s392 = smul.u32 %s32, %s391
        %s393 = sadd.s32 %s33, %s392
        %s394 = smul.u32 2, %s393
        %s395 = smul.u32 %s32, %s33
        %s396 = ssub.s32 0, %s395
        %s397 = smul.u32 2, %s396
        %p398 = scmp.eq.s32.totalorder %s32, 0
        // Predicated region
        $region61: #{tpu_custom_call.1} parent=55 // pred_check
          %p399 = pneg %p398
        $region62: #{tpu_custom_call.1} parent=55 // pred_check_branch
          %401 = sbr.rel (%p399) target = $region64
        $region63: #{tpu_custom_call.1} parent=55 // pred_region
          %p402 = scmp.eq.s32.totalorder %s33, 0
          // Predicated region
          $region65: #{tpu_custom_call.1} parent=63 // pred_check
            %p403 = pneg %p402
          $region66: #{tpu_custom_call.1} parent=63 // pred_check_branch
            %405 = sbr.rel (%p403) target = $region68
          $region67: #{tpu_custom_call.1} parent=63 // pred_region
            %vm406 = vcmask 3072
            %407 = vst.msk [vmem:[#allocation2] sm:$0xf] %vm406, 0.0
            %408 = vst.msk [vmem:[#allocation3] sm:$0xf] %vm406, -inf
          $region68: #{tpu_custom_call.1} parent=63 // pred_fallthru
            _
          %v409 = vld [vmem:[%s355] sm:$0xff]
          // Predicated region
          $region69: #{tpu_custom_call.1} parent=63 // pred_check
            %p410 = pneg %p402
          $region70: #{tpu_custom_call.1} parent=63 // pred_check_branch
            %412 = sbr.rel (%p410) target = $region72
          $region71: #{tpu_custom_call.1} parent=63 // pred_region
            %v413 = vld [vmem:[#allocation2] sm:$0xf]
            %v415 = vcombine.high %v409, %v409
            %vm417 = vcmask 1043456
            %v418 = vsel %vm417, %v409, 0.0
            %v419 = vsel %vm417, %v415, 0.0
            %v420 = vadd.f32 %v418, %v419
            %421 = vadd.xlane.f32.xlu0 %v420
            %v422 = vpop.xlane.xlu0 %421
            %v423 = vadd.f32 %v413, %v422
            %vm424 = vcmask 3072
            %425 = vst.msk [vmem:[#allocation2] sm:$0xf] %vm424, %v423
            %v426 = vld [vmem:[#allocation3] sm:$0xf]
            %v427 = vsel %vm417, %v409, -inf
            %v428 = vsel %vm417, %v415, -inf
            %v429 = vmax.f32 %v427, %v428
            %430 = vmax.xlane.f32.xlu0 %v429
            %v431 = vpop.xlane.xlu0 %430
            %v432 = vmax.f32 %v426, %v431
            %433 = vst.msk [vmem:[#allocation3] sm:$0xf] %vm424, %v432
            %v434 = vld [vmem:[#allocation2] sm:$0xf]
            %v435 = vadd.f32 %v434, 0.0
            %v436 = vmul.f32 %v435, 0.00390625
            %v437 = vld [vmem:[#allocation3] sm:$0xf]
            %v438 = vld [vmem:[%s1] sm:$0xf]
            %v439 = vld [vmem:[%s2] sm:$0x1]
            %441 = vset.pattern.permute.xlu0 0
            %442 = vperm.xlu0 %441, %v436
            %v443 = vpop.permute.xlu0 %442
            %v444 = vlaneseq
            %v445 = vand.u32 %v444, 127
            %v446 = vlaneseq
            %v447 = vshrl.u32 %v446, 7
            %v448 = vsub.s32 %v445, %v447
            %v449 = vrot.slane %v443, %v448
            %vm450 = vcmask 31744
            %v451 = vsel %vm450, %v449, 0
            %v454 = vsel %vm417, %v438, 0
            %456 = vmatprep.subr.mxu0 0.0
            %457 = vmatpush1.msra.mxu0 0.0
            %458 = vmatprep.subr.mxu0 0.0
            %459 = vmatpush1.msra.mxu0 0.0
            %460 = vmatprep.subr.mxu0 0.0
            %461 = vmatpush1.msra.mxu0 0.0
            %462 = vmatprep.subr.mxu0 0.0
            %463 = vmatpush1.msra.mxu0 0.0
            %464 = vmatprep.subr.mxu0 0.0
            %465 = vmatpush1.msra.mxu0 0.0
            %466 = vmatprep.subr.mxu0 0.0
            %467 = vmatpush1.msra.mxu0 0.0
            %468 = vmatprep.subr.mxu0 0.0
            %469 = vmatpush1.msra.mxu0 0.0
            %470 = vmatprep.subr.mxu0 0.0
            %471 = vmatpush1.msra.mxu0 0.0
            %472 = vmatprep.subr.mxu0 0.0
            %473 = vmatpush1.msra.mxu0 0.0
            %474 = vmatprep.subr.mxu0 0.0
            %475 = vmatpush1.msra.mxu0 0.0
            %476 = vmatprep.subr.mxu0 0.0
            %477 = vmatpush1.msra.mxu0 0.0
            %478 = vmatprep.subr.mxu0 0.0
            %479 = vmatpush1.msra.mxu0 0.0
            %480 = vmatprep.subr.mxu0 0.0
            %481 = vmatpush1.msra.mxu0 0.0
            %482 = vmatprep.subr.mxu0 0.0
            %483 = vmatpush1.msra.mxu0 0.0
            %484 = vmatprep.subr.mxu0 0.0
            %485 = vmatpush1.msra.mxu0 0.0
            %486 = vmatprep.subr.mxu0 0.0
            %487 = vmatpush1.msra.mxu0 %v454
            %488 = vmatprep.subr.mxu0 0.0
            %489 = vmatpush2.msra.mxu0 0.0
            %490 = vmatprep.subr.mxu0 0.0
            %491 = vmatpush2.msra.mxu0 0.0
            %492 = vmatprep.subr.mxu0 0.0
            %493 = vmatpush2.msra.mxu0 0.0
            %494 = vmatprep.subr.mxu0 0.0
            %495 = vmatpush2.msra.mxu0 0.0
            %496 = vmatprep.subr.mxu0 0.0
            %497 = vmatpush2.msra.mxu0 0.0
            %498 = vmatprep.subr.mxu0 0.0
            %499 = vmatpush2.msra.mxu0 0.0
            %500 = vmatprep.subr.mxu0 0.0
            %501 = vmatpush2.msra.mxu0 0.0
            %502 = vmatprep.subr.mxu0 0.0
            %503 = vmatpush2.msra.mxu0 0.0
            %504 = vmatprep.subr.mxu0 0.0
            %505 = vmatpush2.msra.mxu0 0.0
            %506 = vmatprep.subr.mxu0 0.0
            %507 = vmatpush2.msra.mxu0 0.0
            %508 = vmatprep.subr.mxu0 0.0
            %509 = vmatpush2.msra.mxu0 0.0
            %510 = vmatprep.subr.mxu0 0.0
            %511 = vmatpush2.msra.mxu0 0.0
            %512 = vmatprep.subr.mxu0 0.0
            %513 = vmatpush2.msra.mxu0 0.0
            %514 = vmatprep.subr.mxu0 0.0
            %515 = vmatpush2.msra.mxu0 0.0
            %516 = vmatprep.subr.mxu0 0.0
            %517 = vmatpush2.msra.mxu0 0.0
            %518 = vmatprep.subr.mxu0 0.0
            %519 = vmatpush2.msra.mxu0 0.0
            %520 = vmatprep.mubr.f32.mxu0 0.0
            %521 = vmatmul.mubr.f32.gmra.mxu0 %v451
            %v522 = vpop.f32.mrf.mxu0
            %v523 = vadd.f32 %v439, %v522
            %v524 = vpop.f32.mrf.mxu0
            %525 = vdwg.mxu0
            %v526 = vmax.f32 %v523, 0.0
            %v527 = vld [vmem:[%s3] sm:$0x3]
            %v528 = vld [vmem:[%s4] sm:$0x1]
            %vm529 = vcmask 15360
            %v531 = vsel %vm529, %v526, 0
            %vm533 = vcmask 1041408
            %v535 = vsel %vm533, %v527, 0
            %537 = vmatprep.subr.mxu0 0.0
            %538 = vmatpush1.msra.mxu0 0.0
            %539 = vmatprep.subr.mxu0 0.0
            %540 = vmatpush1.msra.mxu0 0.0
            %541 = vmatprep.subr.mxu0 0.0
            %542 = vmatpush1.msra.mxu0 0.0
            %543 = vmatprep.subr.mxu0 0.0
            %544 = vmatpush1.msra.mxu0 0.0
            %545 = vmatprep.subr.mxu0 0.0
            %546 = vmatpush1.msra.mxu0 0.0
            %547 = vmatprep.subr.mxu0 0.0
            %548 = vmatpush1.msra.mxu0 0.0
            %549 = vmatprep.subr.mxu0 0.0
            %550 = vmatpush1.msra.mxu0 0.0
            %551 = vmatprep.subr.mxu0 0.0
            %552 = vmatpush1.msra.mxu0 0.0
            %553 = vmatprep.subr.mxu0 0.0
            %554 = vmatpush1.msra.mxu0 0.0
            %555 = vmatprep.subr.mxu0 0.0
            %556 = vmatpush1.msra.mxu0 0.0
            %557 = vmatprep.subr.mxu0 0.0
            %558 = vmatpush1.msra.mxu0 0.0
            %559 = vmatprep.subr.mxu0 0.0
            %560 = vmatpush1.msra.mxu0 0.0
            %561 = vmatprep.subr.mxu0 0.0
            %562 = vmatpush1.msra.mxu0 0.0
            %563 = vmatprep.subr.mxu0 0.0
            %564 = vmatpush1.msra.mxu0 0.0
            %565 = vmatprep.subr.mxu0 0.0
            %566 = vmatpush1.msra.mxu0 0.0
            %567 = vmatprep.subr.mxu0 0.0
            %568 = vmatpush1.msra.mxu0 %v535
            %569 = vmatprep.subr.mxu0 0.0
            %570 = vmatpush2.msra.mxu0 0.0
            %571 = vmatprep.subr.mxu0 0.0
            %572 = vmatpush2.msra.mxu0 0.0
            %573 = vmatprep.subr.mxu0 0.0
            %574 = vmatpush2.msra.mxu0 0.0
            %575 = vmatprep.subr.mxu0 0.0
            %576 = vmatpush2.msra.mxu0 0.0
            %577 = vmatprep.subr.mxu0 0.0
            %578 = vmatpush2.msra.mxu0 0.0
            %579 = vmatprep.subr.mxu0 0.0
            %580 = vmatpush2.msra.mxu0 0.0
            %581 = vmatprep.subr.mxu0 0.0
            %582 = vmatpush2.msra.mxu0 0.0
            %583 = vmatprep.subr.mxu0 0.0
            %584 = vmatpush2.msra.mxu0 0.0
            %585 = vmatprep.subr.mxu0 0.0
            %586 = vmatpush2.msra.mxu0 0.0
            %587 = vmatprep.subr.mxu0 0.0
            %588 = vmatpush2.msra.mxu0 0.0
            %589 = vmatprep.subr.mxu0 0.0
            %590 = vmatpush2.msra.mxu0 0.0
            %591 = vmatprep.subr.mxu0 0.0
            %592 = vmatpush2.msra.mxu0 0.0
            %593 = vmatprep.subr.mxu0 0.0
            %594 = vmatpush2.msra.mxu0 0.0
            %595 = vmatprep.subr.mxu0 0.0
            %596 = vmatpush2.msra.mxu0 0.0
            %597 = vmatprep.subr.mxu0 0.0
            %598 = vmatpush2.msra.mxu0 0.0
            %599 = vmatprep.subr.mxu0 0.0
            %600 = vmatpush2.msra.mxu0 0.0
            %601 = vmatprep.mubr.f32.mxu0 0.0
            %602 = vmatmul.mubr.f32.gmra.mxu0 %v531
            %v603 = vpop.f32.mrf.mxu0
            %v604 = vadd.f32 %v528, %v603
            %v605 = vpop.f32.mrf.mxu0
            %606 = vdwg.mxu0
            %v607 = vxor.u32 %v604, 2147483648
            %v608 = vmul.f32 %v607, 1.442695
            %v609 = vpow.pop %v608
            %v610 = vadd.f32 %v609, 1.0
            %v611 = vrcp.pop %v610
            %v612 = vmul.f32 1.0, %v611
            %614 = vset.pattern.permute.xlu0 0
            %615 = vperm.xlu0 %614, %v437
            %v616 = vpop.permute.xlu0 %615
            %v617 = vlaneseq
            %v618 = vshrl.u32 %v617, 7
            %v619 = vsub.s32 %v445, %v618
            %v620 = vrot.slane %v616, %v619
            %v622 = vmul.f32 %v612, %v620
            %v623 = vld [vmem:[%s5] sm:$0xf]
            %v624 = vld [vmem:[%s6] sm:$0x1]
            %v626 = vsel %vm450, %v622, 0
            %v629 = vsel %vm417, %v623, 0
            %631 = vmatprep.subr.mxu0 0.0
            %632 = vmatpush1.msra.mxu0 0.0
            %633 = vmatprep.subr.mxu0 0.0
            %634 = vmatpush1.msra.mxu0 0.0
            %635 = vmatprep.subr.mxu0 0.0
            %636 = vmatpush1.msra.mxu0 0.0
            %637 = vmatprep.subr.mxu0 0.0
            %638 = vmatpush1.msra.mxu0 0.0
            %639 = vmatprep.subr.mxu0 0.0
            %640 = vmatpush1.msra.mxu0 0.0
            %641 = vmatprep.subr.mxu0 0.0
            %642 = vmatpush1.msra.mxu0 0.0
            %643 = vmatprep.subr.mxu0 0.0
            %644 = vmatpush1.msra.mxu0 0.0
            %645 = vmatprep.subr.mxu0 0.0
            %646 = vmatpush1.msra.mxu0 0.0
            %647 = vmatprep.subr.mxu0 0.0
            %648 = vmatpush1.msra.mxu0 0.0
            %649 = vmatprep.subr.mxu0 0.0
            %650 = vmatpush1.msra.mxu0 0.0
            %651 = vmatprep.subr.mxu0 0.0
            %652 = vmatpush1.msra.mxu0 0.0
            %653 = vmatprep.subr.mxu0 0.0
            %654 = vmatpush1.msra.mxu0 0.0
            %655 = vmatprep.subr.mxu0 0.0
            %656 = vmatpush1.msra.mxu0 0.0
            %657 = vmatprep.subr.mxu0 0.0
            %658 = vmatpush1.msra.mxu0 0.0
            %659 = vmatprep.subr.mxu0 0.0
            %660 = vmatpush1.msra.mxu0 0.0
            %661 = vmatprep.subr.mxu0 0.0
            %662 = vmatpush1.msra.mxu0 %v629
            %663 = vmatprep.subr.mxu0 0.0
            %664 = vmatpush2.msra.mxu0 0.0
            %665 = vmatprep.subr.mxu0 0.0
            %666 = vmatpush2.msra.mxu0 0.0
            %667 = vmatprep.subr.mxu0 0.0
            %668 = vmatpush2.msra.mxu0 0.0
            %669 = vmatprep.subr.mxu0 0.0
            %670 = vmatpush2.msra.mxu0 0.0
            %671 = vmatprep.subr.mxu0 0.0
            %672 = vmatpush2.msra.mxu0 0.0
            %673 = vmatprep.subr.mxu0 0.0
            %674 = vmatpush2.msra.mxu0 0.0
            %675 = vmatprep.subr.mxu0 0.0
            %676 = vmatpush2.msra.mxu0 0.0
            %677 = vmatprep.subr.mxu0 0.0
            %678 = vmatpush2.msra.mxu0 0.0
            %679 = vmatprep.subr.mxu0 0.0
            %680 = vmatpush2.msra.mxu0 0.0
            %681 = vmatprep.subr.mxu0 0.0
            %682 = vmatpush2.msra.mxu0 0.0
            %683 = vmatprep.subr.mxu0 0.0
            %684 = vmatpush2.msra.mxu0 0.0
            %685 = vmatprep.subr.mxu0 0.0
            %686 = vmatpush2.msra.mxu0 0.0
            %687 = vmatprep.subr.mxu0 0.0
            %688 = vmatpush2.msra.mxu0 0.0
            %689 = vmatprep.subr.mxu0 0.0
            %690 = vmatpush2.msra.mxu0 0.0
            %691 = vmatprep.subr.mxu0 0.0
            %692 = vmatpush2.msra.mxu0 0.0
            %693 = vmatprep.subr.mxu0 0.0
            %694 = vmatpush2.msra.mxu0 0.0
            %695 = vmatprep.mubr.f32.mxu0 0.0
            %696 = vmatmul.mubr.f32.gmra.mxu0 %v626
            %v697 = vpop.f32.mrf.mxu0
            %v698 = vadd.f32 %v624, %v697
            %v699 = vpop.f32.mrf.mxu0
            %700 = vdwg.mxu0
            %v701 = vmax.f32 %v698, 0.0
            %v702 = vld [vmem:[%s7] sm:$0x3]
            %v703 = vld [vmem:[%s8] sm:$0x1]
            %v705 = vsel %vm529, %v701, 0
            %v708 = vsel %vm533, %v702, 0
            %710 = vmatprep.subr.mxu0 0.0
            %711 = vmatpush1.msra.mxu0 0.0
            %712 = vmatprep.subr.mxu0 0.0
            %713 = vmatpush1.msra.mxu0 0.0
            %714 = vmatprep.subr.mxu0 0.0
            %715 = vmatpush1.msra.mxu0 0.0
            %716 = vmatprep.subr.mxu0 0.0
            %717 = vmatpush1.msra.mxu0 0.0
            %718 = vmatprep.subr.mxu0 0.0
            %719 = vmatpush1.msra.mxu0 0.0
            %720 = vmatprep.subr.mxu0 0.0
            %721 = vmatpush1.msra.mxu0 0.0
            %722 = vmatprep.subr.mxu0 0.0
            %723 = vmatpush1.msra.mxu0 0.0
            %724 = vmatprep.subr.mxu0 0.0
            %725 = vmatpush1.msra.mxu0 0.0
            %726 = vmatprep.subr.mxu0 0.0
            %727 = vmatpush1.msra.mxu0 0.0
            %728 = vmatprep.subr.mxu0 0.0
            %729 = vmatpush1.msra.mxu0 0.0
            %730 = vmatprep.subr.mxu0 0.0
            %731 = vmatpush1.msra.mxu0 0.0
            %732 = vmatprep.subr.mxu0 0.0
            %733 = vmatpush1.msra.mxu0 0.0
            %734 = vmatprep.subr.mxu0 0.0
            %735 = vmatpush1.msra.mxu0 0.0
            %736 = vmatprep.subr.mxu0 0.0
            %737 = vmatpush1.msra.mxu0 0.0
            %738 = vmatprep.subr.mxu0 0.0
            %739 = vmatpush1.msra.mxu0 0.0
            %740 = vmatprep.subr.mxu0 0.0
            %741 = vmatpush1.msra.mxu0 %v708
            %742 = vmatprep.subr.mxu0 0.0
            %743 = vmatpush2.msra.mxu0 0.0
            %744 = vmatprep.subr.mxu0 0.0
            %745 = vmatpush2.msra.mxu0 0.0
            %746 = vmatprep.subr.mxu0 0.0
            %747 = vmatpush2.msra.mxu0 0.0
            %748 = vmatprep.subr.mxu0 0.0
            %749 = vmatpush2.msra.mxu0 0.0
            %750 = vmatprep.subr.mxu0 0.0
            %751 = vmatpush2.msra.mxu0 0.0
            %752 = vmatprep.subr.mxu0 0.0
            %753 = vmatpush2.msra.mxu0 0.0
            %754 = vmatprep.subr.mxu0 0.0
            %755 = vmatpush2.msra.mxu0 0.0
            %756 = vmatprep.subr.mxu0 0.0
            %757 = vmatpush2.msra.mxu0 0.0
            %758 = vmatprep.subr.mxu0 0.0
            %759 = vmatpush2.msra.mxu0 0.0
            %760 = vmatprep.subr.mxu0 0.0
            %761 = vmatpush2.msra.mxu0 0.0
            %762 = vmatprep.subr.mxu0 0.0
            %763 = vmatpush2.msra.mxu0 0.0
            %764 = vmatprep.subr.mxu0 0.0
            %765 = vmatpush2.msra.mxu0 0.0
            %766 = vmatprep.subr.mxu0 0.0
            %767 = vmatpush2.msra.mxu0 0.0
            %768 = vmatprep.subr.mxu0 0.0
            %769 = vmatpush2.msra.mxu0 0.0
            %770 = vmatprep.subr.mxu0 0.0
            %771 = vmatpush2.msra.mxu0 0.0
            %772 = vmatprep.subr.mxu0 0.0
            %773 = vmatpush2.msra.mxu0 0.0
            %774 = vmatprep.mubr.f32.mxu0 0.0
            %775 = vmatmul.mubr.f32.gmra.mxu0 %v705
            %v776 = vpop.f32.mrf.mxu0
            %v777 = vadd.f32 %v703, %v776
            %v778 = vpop.f32.mrf.mxu0
            %779 = vdwg.mxu0
            %v780 = vxor.u32 %v777, 2147483648
            %v781 = vmul.f32 %v780, 1.442695
            %v782 = vpow.pop %v781
            %v783 = vadd.f32 %v782, 1.0
            %v784 = vrcp.pop %v783
            %v785 = vmul.f32 1.0, %v784
            %v786 = vmul.f32 %v612, %v785
            %v787 = vlaneseq
            %v788 = vshrl.u32 %v787, 7
            %v789 = vsub.s32 0, %v788
            %v790 = vrot.slane %v786, %v789
            %792 = vbcast.lane.b32.xlu0 %v790, 256
            %v793 = vpop.permute.xlu0 %792
            %794 = vst.msk [vmem:[#allocation4] sm:$0xf] %vm424, %v793
          $region72: #{tpu_custom_call.1} parent=63 // pred_fallthru
            _
        $region64: #{tpu_custom_call.1} parent=55 // pred_fallthru
          _
        %p795 = scmp.eq.s32.totalorder %s32, 1
        // Predicated region
        $region73: #{tpu_custom_call.1} parent=55 // pred_check
          %p796 = pneg %p795
        $region74: #{tpu_custom_call.1} parent=55 // pred_check_branch
          %798 = sbr.rel (%p796) target = $region76
        $region75: #{tpu_custom_call.1} parent=55 // pred_region
          %v799 = vld [vmem:[%s355] sm:$0xff]
          %v800 = vld [vmem:[#allocation4] sm:$0xf]
          %802 = vset.pattern.permute.xlu0 0
          %803 = vperm.xlu0 %802, %v800
          %v804 = vpop.permute.xlu0 %803
          %v806 = vunpack.c.l.s4 839922192
          %v807 = vunpack.c.0.s8 %v806
          %v808 = vlaneseq
          %v809 = vshrl.u32 %v808, 7
          %v810 = vsub.s32 %v807, %v809
          %v811 = vrot.slane %v804, %v810
          %v813 = vmul.f32 %v799, %v811
          %814 = vst [vmem:[%s389] sm:$0xff] %v813
        $region76: #{tpu_custom_call.1} parent=55 // pred_fallthru
          _
        %s815 = sand.u32 %s263, 1
        %s816 = scalar_lea.sflag [#allocation7], %s815
        %s817 = sand.u32 %s263, 1
        %s818 = smul.addr %s817, 8
        %s819 = scalar_lea.vmem [#allocation8], %s818
        // Predicated region
        $region77: #{tpu_custom_call.1} parent=55 // pred_check
          %p820 = pneg %p273
        $region78: #{tpu_custom_call.1} parent=55 // pred_check_branch
          %822 = sbr.rel (%p820) target = $region80
        $region79: #{tpu_custom_call.1} parent=55 // pred_region
          %s823 = smul.u32 %s32, %s33
          %s824 = ssub.s32 0, %s823
          %s825 = smul.u32 2, %s824
          %s827 = ssub.s32 128, 128
          %828 = vsyncadd %s816, %s827
          %s829 = smul.addr %s31, 2
          %s830 = sadd.s32 %s825, %s829
          %s831 = smul.addr %s830, 64
          %s832 = scalar_lea.hbm %s9, %s831
          %s834 = sshll.u32 %s819, 4
          %s835 = int_to_ptr.vmem [resolvable:$true] %s834
          %837 = dma.vmem_to_hbm [thread:$0]  %s835, 128, %s832, %s816
        $region80: #{tpu_custom_call.1} parent=55 // pred_fallthru
          _
      $region56: #{tpu_custom_call.1} parent=5 // pred_fallthru
        _
      %p838 = scmp.le.s32.totalorder 2, %s21
      // Predicated region
      $region81: #{tpu_custom_call.1} parent=5 // pred_check
        %p839 = pneg %p838
      $region82: #{tpu_custom_call.1} parent=5 // pred_check_branch
        %841 = sbr.rel (%p839) target = $region84
      $region83: #{tpu_custom_call.1} parent=5 // pred_region
        %s842 = ssub.s32 %s21, 2
        // Predicated region
        $region85: #{tpu_custom_call.1} parent=83 // pred_check
          %p843 = pneg %p279
        $region86: #{tpu_custom_call.1} parent=83 // pred_check_branch
          %845 = sbr.rel (%p843) target = $region88
        $region87: #{tpu_custom_call.1} parent=83 // pred_region
          %s846 = sand.u32 %s264, 1
          %s847 = scalar_lea.sflag [#allocation7], %s846
          %s848 = sand.u32 %s264, 1
          %s849 = smul.addr %s848, 8
          %s850 = scalar_lea.vmem [#allocation8], %s849
          %851 = dma.done %s847, 128
        $region88: #{tpu_custom_call.1} parent=83 // pred_fallthru
          _
      $region84: #{tpu_custom_call.1} parent=5 // pred_fallthru
        _
    $region6: #{tpu_custom_call.1} parent=1 // loop_footer
      %s25 = sadd.s32 1, %s21
    $region7: #{tpu_custom_call.1} parent=1 // loop_footer_branch
      %20 = sbr.rel target = $region3
    $region8: #{tpu_custom_call.1} parent=1 // loop_exit
      _
    %852 = vsyncpa [#allocation6], 1
    %s853 = scalar_lea.sflag [#allocation6], 1
    %854 = vsyncpa %s853, 1
    %855 = vsyncpa [#allocation7], 1
    %s856 = scalar_lea.sflag [#allocation7], 1
    %857 = vsyncpa %s856, 1

</llo_original>
